<compile_context>
chip_gen: v7x
topology: tpu7x:2x2x1
jax: 0.10.0
libtpu: 0.0.40
codegen_flags: <defaults>
</compile_context>

<pallas_src>
import math
import jax
import jax.numpy as jnp
from jax import lax
from jax.experimental import pallas as pl
from jax.experimental.pallas import tpu as pltpu


def _mha_kernel(q_ref, k_ref, v_ref, wqT_ref, wkT_ref, wvT_ref,
                out_ref, attn_ref, kp_sc, vp_sc):
    # blocks: q_ref (1, TN, qdim), k_ref (1, M, kdim), v_ref (1, M, vdim),
    # w*T_ref (in_dim, E)  [pre-transposed, scale pre-folded],
    # out_ref (1, TN, E), attn_ref (1, TN, M),
    # kp_sc / vp_sc: (M, E) bf16 VMEM scratch carried across the N-tile axis.

    # K/V projections: once per batch (first query tile only).
    @pl.when(pl.program_id(1) == 0)
    def _():
        k_b = k_ref[0].astype(jnp.bfloat16)                       # (M, kdim)
        v_b = v_ref[0].astype(jnp.bfloat16)                       # (M, vdim)
        kp_sc[...] = jnp.dot(k_b, wkT_ref[...],
                             preferred_element_type=jnp.float32
                             ).astype(jnp.bfloat16)               # (M, E)
        vp_sc[...] = jnp.dot(v_b, wvT_ref[...],
                             preferred_element_type=jnp.float32
                             ).astype(jnp.bfloat16)               # (M, E)

    # Q projection (attention scale already folded into wqT in the wrapper).
    q_b = q_ref[0].astype(jnp.bfloat16)                           # (TN, qdim)
    qp = jnp.dot(q_b, wqT_ref[...],
                 preferred_element_type=jnp.float32)              # (TN, E) f32

    # dots = qp @ kp^T  — contract last axes directly, no transpose copy.
    dots = lax.dot_general(qp.astype(jnp.bfloat16), kp_sc[...],
                           dimension_numbers=(((1,), (1,)), ((), ())),
                           preferred_element_type=jnp.float32)    # (TN, M)

    # softmax (max-subtracted), reciprocal on the EUP slot.
    m = jnp.max(dots, axis=-1, keepdims=True)
    e = jnp.exp(dots - m)
    denom = jnp.sum(e, axis=-1, keepdims=True)
    attn = e * pl.reciprocal(denom, approx=True)                  # (TN, M)

    out = jnp.dot(attn.astype(jnp.bfloat16), vp_sc[...],
                  preferred_element_type=jnp.float32)             # (TN, E)

    out_ref[0] = out.astype(out_ref.dtype)
    attn_ref[0] = attn.astype(attn_ref.dtype)


def multi_head_attention(q, k, v, wq, wk, wv, embed_dim, *, tn=128):
    """q: (B, N, qdim), k: (B, M, kdim), v: (B, M, vdim).
    wq/wk/wv: raw (embed_dim, in_dim) EqualizedLinear weights (equalization
    scale 1/sqrt(fan_in) and the attention scale are applied here).
    Returns (out (B, N, embed_dim), (attn (B, N, M),))."""
    B, N, qdim = q.shape
    _, M, kdim = k.shape
    _, _, vdim = v.shape
    scale = embed_dim ** (-0.5)

    # Parameter glue (wrapper, not kernel work):
    #  - EqualizedLinear runtime scaling by 1/sqrt(fan_in)
    #  - attention scale folded into Wq
    #  - pre-transpose to (in_dim, embed) so the kernel never transposes
    #  - bf16 operands for the MXU fast path (f32 accumulation in-kernel)
    wqT = (wq * (scale / math.sqrt(qdim))).T.astype(jnp.bfloat16)  # (qdim, E)
    wkT = (wk * (1.0 / math.sqrt(kdim))).T.astype(jnp.bfloat16)    # (kdim, E)
    wvT = (wv * (1.0 / math.sqrt(vdim))).T.astype(jnp.bfloat16)    # (vdim, E)

    tn = min(tn, N)
    n_tiles = pl.cdiv(N, tn)

    # TODO(synk): for very small B*N (like the test shapes) packing several
    # batches per grid step would amortize the ~0.35us/step overhead; kept the
    # general N-tiled structure instead so real sequence lengths pipeline.
    out, attn = pl.pallas_call(
        _mha_kernel,
        out_shape=(
            jax.ShapeDtypeStruct((B, N, embed_dim), jnp.float32),
            jax.ShapeDtypeStruct((B, N, M), jnp.float32),
        ),
        grid_spec=pltpu.PrefetchScalarGridSpec(
            num_scalar_prefetch=0,
            grid=(B, n_tiles),
            in_specs=[
                pl.BlockSpec((1, tn, qdim), lambda b, n: (b, n, 0)),
                pl.BlockSpec((1, M, kdim), lambda b, n: (b, 0, 0)),
                pl.BlockSpec((1, M, vdim), lambda b, n: (b, 0, 0)),
                pl.BlockSpec((qdim, embed_dim), lambda b, n: (0, 0)),
                pl.BlockSpec((kdim, embed_dim), lambda b, n: (0, 0)),
                pl.BlockSpec((vdim, embed_dim), lambda b, n: (0, 0)),
            ],
            out_specs=[
                pl.BlockSpec((1, tn, embed_dim), lambda b, n: (b, n, 0)),
                pl.BlockSpec((1, tn, M), lambda b, n: (b, n, 0)),
            ],
            scratch_shapes=[
                pltpu.VMEM((M, embed_dim), jnp.bfloat16),   # kp cache
                pltpu.VMEM((M, embed_dim), jnp.bfloat16),   # vp cache
            ],
        ),
        compiler_params=pltpu.CompilerParams(
            # batch axis sharded across TCs (v7x); N axis carries kp/vp scratch.
            dimension_semantics=("parallel", "arbitrary"),
        ),
    )(q, k, v, wqT, wkT, wvT)

    return out, (attn,)


def _reference(q, k, v, wq, wk, wv, embed_dim):
    """Pure-JAX f32 reference mirroring the PyTorch forward."""
    scale = embed_dim ** (-0.5)
    qp = jnp.einsum("bnd,ed->bne", q, wq * (1.0 / math.sqrt(q.shape[-1])))
    kp = jnp.einsum("bmd,ed->bme", k, wk * (1.0 / math.sqrt(k.shape[-1])))
    vp = jnp.einsum("bmd,ed->bme", v, wv * (1.0 / math.sqrt(v.shape[-1])))
    dots = jnp.einsum("bne,bme->bnm", qp, kp) * scale
    attn = jax.nn.softmax(dots, axis=-1)
    out = jnp.einsum("bnm,bme->bne", attn, vp)
    return out, attn


if __name__ == "__main__":
    # small shapes consistent with the module
    B, N, M = 2, 8, 8
    qdim, kdim, vdim, embed_dim = 16, 16, 16, 32

    key = jax.random.PRNGKey(0)
    kq, kk, kv_, kwq, kwk, kwv = jax.random.split(key, 6)

    q = jax.random.normal(kq, (B, N, qdim), dtype=jnp.float32)
    k = jax.random.normal(kk, (B, M, kdim), dtype=jnp.float32)
    v = jax.random.normal(kv_, (B, M, vdim), dtype=jnp.float32)

    # EqualizedLinear weights: N(0,1) init (equalization scale applied at forward)
    wq = jax.random.normal(kwq, (embed_dim, qdim), dtype=jnp.float32)
    wk = jax.random.normal(kwk, (embed_dim, kdim), dtype=jnp.float32)
    wv = jax.random.normal(kwv, (embed_dim, vdim), dtype=jnp.float32)

    out, (attn,) = multi_head_attention(q, k, v, wq, wk, wv, embed_dim)
    out = jax.block_until_ready(out)
    attn = jax.block_until_ready(attn)

    out_ref, attn_ref = _reference(q, k, v, wq, wk, wv, embed_dim)
    # bf16 matmul operands (+ approx reciprocal) vs. an f32 reference: use a
    # correspondingly looser tolerance.
    assert jnp.allclose(out, out_ref, atol=2e-2, rtol=2e-2), "out mismatch"
    assert jnp.allclose(attn, attn_ref, atol=2e-2, rtol=2e-2), "attn mismatch"

    print("KERNEL_OK")
</pallas_src>

<mosaic_0001>
module attributes {stable_mosaic.version = 11 : i64} {
  func.func @_mha_kernel(%arg0: i32, %arg1: i32, %arg2: memref<1x8x16xf32, #tpu.memory_space<vmem>>, %arg3: memref<1x8x16xf32, #tpu.memory_space<vmem>>, %arg4: memref<1x8x16xf32, #tpu.memory_space<vmem>>, %arg5: memref<16x32xbf16, #tpu.memory_space<vmem>>, %arg6: memref<16x32xbf16, #tpu.memory_space<vmem>>, %arg7: memref<16x32xbf16, #tpu.memory_space<vmem>>, %arg8: memref<1x8x32xf32, #tpu.memory_space<vmem>>, %arg9: memref<1x8x8xf32, #tpu.memory_space<vmem>>, %arg10: memref<8x32xbf16, #tpu.memory_space<vmem>>, %arg11: memref<8x32xbf16, #tpu.memory_space<vmem>>) attributes {dimension_semantics = [#tpu.dimension_semantics<parallel>, #tpu.dimension_semantics<arbitrary>], iteration_bounds = array<i64: 2, 1>, scalar_prefetch = 0 : i64, scratch_operands = 2 : i64, tpu.core_type = #tpu.core_type<tc>, window_params = [{transform_indices = @transform_0, window_bounds = array<i64: 1, 8, 16>}, {transform_indices = @transform_1, window_bounds = array<i64: 1, 8, 16>}, {transform_indices = @transform_2, window_bounds = array<i64: 1, 8, 16>}, {pipeline_mode = #tpu.pipeline_mode<synchronous>, transform_indices = @transform_3, window_bounds = array<i64: 16, 32>}, {pipeline_mode = #tpu.pipeline_mode<synchronous>, transform_indices = @transform_4, window_bounds = array<i64: 16, 32>}, {pipeline_mode = #tpu.pipeline_mode<synchronous>, transform_indices = @transform_5, window_bounds = array<i64: 16, 32>}, {transform_indices = @transform_6, window_bounds = array<i64: 1, 8, 32>}, {transform_indices = @transform_7, window_bounds = array<i64: 1, 8, 8>}]} {
    %c0_i32 = arith.constant 0 : i32
    %0 = arith.cmpi eq, %arg1, %c0_i32 : i32
    %1 = arith.extui %0 : i1 to i32
    %c0_i32_0 = arith.constant 0 : i32
    %2 = arith.cmpi ne, %1, %c0_i32_0 : i32
    scf.if %2 {
      %c0_19 = arith.constant 0 : index
      %c0_20 = arith.constant 0 : index
      %c0_21 = arith.constant 0 : index
      %30 = vector.load %arg3[%c0_19, %c0_20, %c0_21] : memref<1x8x16xf32, #tpu.memory_space<vmem>>, vector<1x8x16xf32>
      %31 = vector.shape_cast %30 : vector<1x8x16xf32> to vector<8x16xf32>
      %32 = arith.truncf %31 : vector<8x16xf32> to vector<8x16xbf16>
      %c0_22 = arith.constant 0 : index
      %c0_23 = arith.constant 0 : index
      %c0_24 = arith.constant 0 : index
      %33 = vector.load %arg4[%c0_22, %c0_23, %c0_24] : memref<1x8x16xf32, #tpu.memory_space<vmem>>, vector<1x8x16xf32>
      %34 = vector.shape_cast %33 : vector<1x8x16xf32> to vector<8x16xf32>
      %35 = arith.truncf %34 : vector<8x16xf32> to vector<8x16xbf16>
      %c0_25 = arith.constant 0 : index
      %c0_26 = arith.constant 0 : index
      %36 = vector.load %arg6[%c0_25, %c0_26] : memref<16x32xbf16, #tpu.memory_space<vmem>>, vector<16x32xbf16>
      %cst_27 = arith.constant dense<0.000000e+00> : vector<8x32xf32>
      %37 = tpu.matmul %32, %36, %cst_27 {dimension_numbers = #tpu.dot_dimension_numbers<[1], [0], [0], [1], [0, 0, 1, 1], [], []>} : vector<8x16xbf16>, vector<16x32xbf16>, vector<8x32xf32> -> vector<8x32xf32>
      %38 = arith.truncf %37 : vector<8x32xf32> to vector<8x32xbf16>
      %c0_28 = arith.constant 0 : index
      %c0_29 = arith.constant 0 : index
      %39 = vector.load %arg10[%c0_28, %c0_29] : memref<8x32xbf16, #tpu.memory_space<vmem>>, vector<8x32xbf16>
      tpu.vector_store %arg10[%c0_28, %c0_29], %38 {strides = array<i32>} : memref<8x32xbf16, #tpu.memory_space<vmem>>, vector<8x32xbf16>,
      %c0_30 = arith.constant 0 : index
      %c0_31 = arith.constant 0 : index
      %40 = vector.load %arg7[%c0_30, %c0_31] : memref<16x32xbf16, #tpu.memory_space<vmem>>, vector<16x32xbf16>
      %cst_32 = arith.constant dense<0.000000e+00> : vector<8x32xf32>
      %41 = tpu.matmul %35, %40, %cst_32 {dimension_numbers = #tpu.dot_dimension_numbers<[1], [0], [0], [1], [0, 0, 1, 1], [], []>} : vector<8x16xbf16>, vector<16x32xbf16>, vector<8x32xf32> -> vector<8x32xf32>
      %42 = arith.truncf %41 : vector<8x32xf32> to vector<8x32xbf16>
      %c0_33 = arith.constant 0 : index
      %c0_34 = arith.constant 0 : index
      %43 = vector.load %arg11[%c0_33, %c0_34] : memref<8x32xbf16, #tpu.memory_space<vmem>>, vector<8x32xbf16>
      tpu.vector_store %arg11[%c0_33, %c0_34], %42 {strides = array<i32>} : memref<8x32xbf16, #tpu.memory_space<vmem>>, vector<8x32xbf16>,
    } else {
    }
    %c0 = arith.constant 0 : index
    %c0_1 = arith.constant 0 : index
    %c0_2 = arith.constant 0 : index
    %3 = vector.load %arg2[%c0, %c0_1, %c0_2] : memref<1x8x16xf32, #tpu.memory_space<vmem>>, vector<1x8x16xf32>
    %4 = vector.shape_cast %3 : vector<1x8x16xf32> to vector<8x16xf32>
    %5 = arith.truncf %4 : vector<8x16xf32> to vector<8x16xbf16>
    %c0_3 = arith.constant 0 : index
    %c0_4 = arith.constant 0 : index
    %6 = vector.load %arg5[%c0_3, %c0_4] : memref<16x32xbf16, #tpu.memory_space<vmem>>, vector<16x32xbf16>
    %cst = arith.constant dense<0.000000e+00> : vector<8x32xf32>
    %7 = tpu.matmul %5, %6, %cst {dimension_numbers = #tpu.dot_dimension_numbers<[1], [0], [0], [1], [0, 0, 1, 1], [], []>} : vector<8x16xbf16>, vector<16x32xbf16>, vector<8x32xf32> -> vector<8x32xf32>
    %8 = arith.truncf %7 : vector<8x32xf32> to vector<8x32xbf16>
    %c0_5 = arith.constant 0 : index
    %c0_6 = arith.constant 0 : index
    %9 = vector.load %arg10[%c0_5, %c0_6] : memref<8x32xbf16, #tpu.memory_space<vmem>>, vector<8x32xbf16>
    %cst_7 = arith.constant dense<0.000000e+00> : vector<8x8xf32>
    %10 = tpu.matmul %8, %9, %cst_7 {dimension_numbers = #tpu.dot_dimension_numbers<[1], [1], [0], [0], [0, 0, 1, 0], [], []>} : vector<8x32xbf16>, vector<8x32xbf16>, vector<8x8xf32> -> vector<8x8xf32>
    %cst_8 = arith.constant dense<0xFF800000> : vector<8xf32>
    %11 = vector.multi_reduction <maximumf>, %10, %cst_8 [1] : vector<8x8xf32> to vector<8xf32>
    %12 = vector.shape_cast %11 : vector<8xf32> to vector<8x1xf32>
    %13 = vector.broadcast %12 : vector<8x1xf32> to vector<8x8xf32>
    %14 = arith.subf %10, %13 : vector<8x8xf32>
    %15 = math.exp %14 : vector<8x8xf32>
    %cst_9 = arith.constant dense<0.000000e+00> : vector<8xf32>
    %16 = vector.multi_reduction <add>, %15, %cst_9 [1] : vector<8x8xf32> to vector<8xf32>
    %17 = vector.shape_cast %16 : vector<8xf32> to vector<8x1xf32>
    %18 = tpu.reciprocal %17 {approx = true} : vector<8x1xf32> -> vector<8x1xf32>
    %19 = vector.broadcast %18 : vector<8x1xf32> to vector<8x8xf32>
    %20 = arith.mulf %15, %19 : vector<8x8xf32>
    %21 = arith.truncf %20 : vector<8x8xf32> to vector<8x8xbf16>
    %c0_10 = arith.constant 0 : index
    %c0_11 = arith.constant 0 : index
    %22 = vector.load %arg11[%c0_10, %c0_11] : memref<8x32xbf16, #tpu.memory_space<vmem>>, vector<8x32xbf16>
    %cst_12 = arith.constant dense<0.000000e+00> : vector<8x32xf32>
    %23 = tpu.matmul %21, %22, %cst_12 {dimension_numbers = #tpu.dot_dimension_numbers<[1], [0], [0], [1], [0, 0, 1, 1], [], []>} : vector<8x8xbf16>, vector<8x32xbf16>, vector<8x32xf32> -> vector<8x32xf32>
    %c0_13 = arith.constant 0 : index
    %c0_14 = arith.constant 0 : index
    %c0_15 = arith.constant 0 : index
    %24 = vector.load %arg8[%c0_13, %c0_14, %c0_15] : memref<1x8x32xf32, #tpu.memory_space<vmem>>, vector<1x8x32xf32>
    %25 = vector.shape_cast %24 : vector<1x8x32xf32> to vector<8x32xf32>
    %26 = vector.shape_cast %23 : vector<8x32xf32> to vector<1x8x32xf32>
    tpu.vector_store %arg8[%c0_13, %c0_14, %c0_15], %26 {strides = array<i32>} : memref<1x8x32xf32, #tpu.memory_space<vmem>>, vector<1x8x32xf32>,
    %c0_16 = arith.constant 0 : index
    %c0_17 = arith.constant 0 : index
    %c0_18 = arith.constant 0 : index
    %27 = vector.load %arg9[%c0_16, %c0_17, %c0_18] : memref<1x8x8xf32, #tpu.memory_space<vmem>>, vector<1x8x8xf32>
    %28 = vector.shape_cast %27 : vector<1x8x8xf32> to vector<8x8xf32>
    %29 = vector.shape_cast %20 : vector<8x8xf32> to vector<1x8x8xf32>
    tpu.vector_store %arg9[%c0_16, %c0_17, %c0_18], %29 {strides = array<i32>} : memref<1x8x8xf32, #tpu.memory_space<vmem>>, vector<1x8x8xf32>,
    return
  }
  func.func @transform_0(%arg0: i32, %arg1: i32) -> (i32, i32, i32) {
    %c0_i32 = arith.constant 0 : i32
    %c0_i32_0 = arith.constant 0 : i32
    return %arg0, %arg1, %c0_i32 : i32, i32, i32
  }
  func.func @transform_1(%arg0: i32, %arg1: i32) -> (i32, i32, i32) {
    %c0_i32 = arith.constant 0 : i32
    %c0_i32_0 = arith.constant 0 : i32
    %c0_i32_1 = arith.constant 0 : i32
    return %arg0, %c0_i32, %c0_i32_0 : i32, i32, i32
  }
  func.func @transform_2(%arg0: i32, %arg1: i32) -> (i32, i32, i32) {
    %c0_i32 = arith.constant 0 : i32
    %c0_i32_0 = arith.constant 0 : i32
    %c0_i32_1 = arith.constant 0 : i32
    return %arg0, %c0_i32, %c0_i32_0 : i32, i32, i32
  }
  func.func @transform_3(%arg0: i32, %arg1: i32) -> (i32, i32) {
    %c0_i32 = arith.constant 0 : i32
    %c0_i32_0 = arith.constant 0 : i32
    %c0_i32_1 = arith.constant 0 : i32
    return %c0_i32, %c0_i32_0 : i32, i32
  }
  func.func @transform_4(%arg0: i32, %arg1: i32) -> (i32, i32) {
    %c0_i32 = arith.constant 0 : i32
    %c0_i32_0 = arith.constant 0 : i32
    %c0_i32_1 = arith.constant 0 : i32
    return %c0_i32, %c0_i32_0 : i32, i32
  }
  func.func @transform_5(%arg0: i32, %arg1: i32) -> (i32, i32) {
    %c0_i32 = arith.constant 0 : i32
    %c0_i32_0 = arith.constant 0 : i32
    %c0_i32_1 = arith.constant 0 : i32
    return %c0_i32, %c0_i32_0 : i32, i32
  }
  func.func @transform_6(%arg0: i32, %arg1: i32) -> (i32, i32, i32) {
    %c0_i32 = arith.constant 0 : i32
    %c0_i32_0 = arith.constant 0 : i32
    return %arg0, %arg1, %c0_i32 : i32, i32, i32
  }
  func.func @transform_7(%arg0: i32, %arg1: i32) -> (i32, i32, i32) {
    %c0_i32 = arith.constant 0 : i32
    %c0_i32_0 = arith.constant 0 : i32
    return %arg0, %arg1, %c0_i32 : i32, i32, i32
  }
}

</mosaic_0001>

<llo_original>
// kernel: tpu_custom_call.1
$region0: #{tpu_custom_call.1}
  #allocation0 [shape = 'u32[]', space=smem, size = 0x4, offset = 0x4, fixed_abs, tag = 'smem constant byte address 0x4 - core index']
  #allocation1 [shape = 'u32[144,128]{1,0:T(1,128)}', space=vmem, size = 0x12000, scoped, tag = 'internal scratch']
  #allocation2 [shape = 'bf16[8,32]{1,0:T(8,128)(2,1)}', space=vmem, size = 0x800, scoped, tag = 'scratch operand']
  #allocation3 [shape = 'bf16[8,32]{1,0:T(8,128)(2,1)}', space=vmem, size = 0x800, scoped, tag = 'scratch operand']
  %s0 = inlined_call_operand.hbm [shape: f32[2,8,16], index: 0, kind: input, shape index: {}]
  %s1 = inlined_call_operand.hbm [shape: f32[2,8,16], index: 1, kind: input, shape index: {}]
  %s2 = inlined_call_operand.hbm [shape: f32[2,8,16], index: 2, kind: input, shape index: {}]
  %s3 = inlined_call_operand.vmem [shape: bf16[16,32], index: 3, kind: input, shape index: {}]
  %s4 = inlined_call_operand.hbm [shape: bf16[16,32], index: 4, kind: input, shape index: {}]
  %s5 = inlined_call_operand.vmem [shape: bf16[16,32], index: 5, kind: input, shape index: {}]
  %s6 = inlined_call_operand.hbm [shape: f32[2,8,32], index: 6, kind: output, shape index: {0}]
  %s7 = inlined_call_operand.hbm [shape: f32[2,8,8], index: 7, kind: output, shape index: {1}]
  %8 = xla_tuple %s6, %s7
  %s9 = sld [smem:[#allocation0]]
  $region85: #{tpu_custom_call.1} parent=0
    _
  %s11 = ssub.s32 1, %s9
  %s12 = scalar_select 0, %s11, %s9
  $region1: #{tpu_custom_call.1} parent=0
    #allocation4 [shape = 'u8[8192]{0}', space=vmem, size = 0x2000, scoped, tag = 'input window, operand 0']
    #allocation5 [shape = 's32[2]{0}', space=sflag, size = 0x8, scoped, tag = 'scoped memory for tpu_custom_call.1']
    #allocation6 [shape = 's32[2]{0}', space=sflag, size = 0x8, scoped, tag = 'scoped memory for tpu_custom_call.1']
    #allocation7 [shape = 'u8[8192]{0}', space=vmem, size = 0x2000, scoped, tag = 'input window, operand 1']
    #allocation8 [shape = 's32[2]{0}', space=sflag, size = 0x8, scoped, tag = 'scoped memory for tpu_custom_call.1']
    #allocation9 [shape = 'u8[8192]{0}', space=vmem, size = 0x2000, scoped, tag = 'input window, operand 2']
    #allocation10 [shape = 'u8[4096]{0}', space=vmem, size = 0x1000, scoped, tag = 'input window, operand 4, single buffered']
    #allocation11 [shape = 's32[1]{0}', space=sflag, size = 0x4, scoped, tag = 'scoped memory for tpu_custom_call.1']
    #allocation12 [shape = 'u8[8192]{0}', space=vmem, size = 0x2000, scoped, tag = 'output window, operand 0']
    #allocation13 [shape = 'u8[8192]{0}', space=vmem, size = 0x2000, scoped, tag = 'output window, operand 1']
    #allocation14 [shape = 's32[2]{0}', space=sflag, size = 0x8, scoped, tag = 'scoped memory for tpu_custom_call.1']
    %13 = vsyncpa [#allocation5], 0
    %s14 = scalar_lea.sflag [#allocation5], 1
    %15 = vsyncpa %s14, 0
    %16 = vsyncpa [#allocation8], 0
    %s17 = scalar_lea.sflag [#allocation8], 1
    %18 = vsyncpa %s17, 0
    %19 = vsyncpa [#allocation11], 0
    %20 = vsyncpa [#allocation6], 0
    %s21 = scalar_lea.sflag [#allocation6], 1
    %22 = vsyncpa %s21, 0
    %23 = vsyncpa [#allocation14], 0
    %s24 = scalar_lea.sflag [#allocation14], 1
    %25 = vsyncpa %s24, 0
    loop: start=0, step=1, limit=4
    $region2: #{tpu_custom_call.1} parent=1 // loop_pre_header
      _
    $region3: #{tpu_custom_call.1} parent=1 // loop_header
      %s27 = sphi 0, %s31
      %p28 = scmp.ge.s32.totalorder %s27, 4
      %s34 = sphi 0, %s46
      %s35 = sphi 0, %s42
      %s36 = sphi 0, %s34
      %s37 = sphi 0, %s35
      %s38 = sphi 0, %s36
      %s39 = sphi 0, %s37
      %s51 = sphi 0, %s53
      %s54 = sphi 0, %s51
      %s55 = sphi 0, %s54
      %s71 = sphi 0, %s55
      %s77 = sphi 0, %s79
      %s80 = sphi 0, %s77
      %s81 = sphi 0, %s80
      %s97 = sphi 0, %s81
      %s103 = sphi 0, %s105
      %s106 = sphi 0, %s103
      %s107 = sphi 0, %s106
      %s123 = sphi 0, %s107
      %s127 = sphi 0, %s127
      %s129 = sphi 0, %s127
      %s130 = sphi 0, %s129
      %s144 = sphi 0, %s130
      %s148 = sphi 0, %s148
      %s150 = sphi 0, %s148
      %s151 = sphi 0, %s150
      %s165 = sphi 0, %s151
      %s169 = sphi 0, %s169
      %s171 = sphi 0, %s169
      %s172 = sphi 0, %s171
      %s186 = sphi 0, %s172
      %s194 = sphi 0, %s196
      %s197 = sphi 0, %s194
      %s198 = sphi 0, %s197
      %s214 = sphi 0, %s198
      %s222 = sphi 0, %s224
      %s225 = sphi 0, %s222
      %s226 = sphi 0, %s225
      %s242 = sphi 0, %s226
    $region4: #{tpu_custom_call.1} parent=1 // loop_header_branch
      %30 = sbr.rel (%p28) target = $region8
    $region5: #{tpu_custom_call.1} parent=1 // loop_body
      %s32 = ssub.s32 %s27, 1
      %s33 = ssub.s32 %s27, 2
      %s40 = sadd.s32 1, %s35
      %p41 = scmp.ge.s32.totalorder %s40, 1
      %s42 = scalar_select %p41, 0, %s40
      %s43 = sadd.s32 1, %s34
      %s44 = scalar_select %p41, %s43, %s34
      %p45 = scmp.ge.s32.totalorder %s44, 2
      %s46 = scalar_select %p45, 0, %s44
      %s47 = ssub.s32 %s34, %s46
      %s48 = ssub.s32 %s35, %s42
      %s49 = sor.u32 %s47, %s48
      %p50 = scmp.eq.s32.totalorder %s49, 0
      %s52 = sadd.s32 %s51, 1
      %s53 = scalar_select %p50, %s51, %s52
      %p56 = pneg %p50
      %p57 = scmp.eq.s32.totalorder %s27, 1
      %p58 = por %p56, %p57
      %p59 = scmp.ne.s32.totalorder %s51, %s54
      %p60 = scmp.eq.s32.totalorder %s27, 0
      %p61 = por %p59, %p60
      %p62 = scmp.ne.s32.totalorder %s51, %s54
      %p63 = scmp.eq.s32.totalorder %s32, 1
      %p64 = por %p62, %p63
      %p65 = scmp.ne.s32.totalorder %s54, %s55
      %p66 = scmp.eq.s32.totalorder %s32, 0
      %p67 = por %p65, %p66
      %p68 = scmp.ne.s32.totalorder %s54, %s55
      %p69 = scmp.eq.s32.totalorder %s33, 1
      %p70 = por %p68, %p69
      %p72 = scmp.ne.s32.totalorder %s55, %s71
      %p73 = scmp.eq.s32.totalorder %s33, 0
      %p74 = por %p72, %p73
      %s75 = ssub.s32 %s34, %s46
      %p76 = scmp.eq.s32.totalorder %s75, 0
      %s78 = sadd.s32 %s77, 1
      %s79 = scalar_select %p76, %s77, %s78
      %p82 = pneg %p76
      %p83 = scmp.eq.s32.totalorder %s27, 1
      %p84 = por %p82, %p83
      %p85 = scmp.ne.s32.totalorder %s77, %s80
      %p86 = scmp.eq.s32.totalorder %s27, 0
      %p87 = por %p85, %p86
      %p88 = scmp.ne.s32.totalorder %s77, %s80
      %p89 = scmp.eq.s32.totalorder %s32, 1
      %p90 = por %p88, %p89
      %p91 = scmp.ne.s32.totalorder %s80, %s81
      %p92 = scmp.eq.s32.totalorder %s32, 0
      %p93 = por %p91, %p92
      %p94 = scmp.ne.s32.totalorder %s80, %s81
      %p95 = scmp.eq.s32.totalorder %s33, 1
      %p96 = por %p94, %p95
      %p98 = scmp.ne.s32.totalorder %s81, %s97
      %p99 = scmp.eq.s32.totalorder %s33, 0
      %p100 = por %p98, %p99
      %s101 = ssub.s32 %s34, %s46
      %p102 = scmp.eq.s32.totalorder %s101, 0
      %s104 = sadd.s32 %s103, 1
      %s105 = scalar_select %p102, %s103, %s104
      %p108 = pneg %p102
      %p109 = scmp.eq.s32.totalorder %s27, 1
      %p110 = por %p108, %p109
      %p111 = scmp.ne.s32.totalorder %s103, %s106
      %p112 = scmp.eq.s32.totalorder %s27, 0
      %p113 = por %p111, %p112
      %p114 = scmp.ne.s32.totalorder %s103, %s106
      %p115 = scmp.eq.s32.totalorder %s32, 1
      %p116 = por %p114, %p115
      %p117 = scmp.ne.s32.totalorder %s106, %s107
      %p118 = scmp.eq.s32.totalorder %s32, 0
      %p119 = por %p117, %p118
      %p120 = scmp.ne.s32.totalorder %s106, %s107
      %p121 = scmp.eq.s32.totalorder %s33, 1
      %p122 = por %p120, %p121
      %p124 = scmp.ne.s32.totalorder %s107, %s123
      %p125 = scmp.eq.s32.totalorder %s33, 0
      %p126 = por %p124, %p125
      %s128 = sadd.s32 %s127, 1
      %p131 = scmp.eq.s32.totalorder %s27, 1
      %p132 = scmp.ne.s32.totalorder %s127, %s129
      %p133 = scmp.eq.s32.totalorder %s27, 0
      %p134 = por %p132, %p133
      %p135 = scmp.ne.s32.totalorder %s127, %s129
      %p136 = scmp.eq.s32.totalorder %s32, 1
      %p137 = por %p135, %p136
      %p138 = scmp.ne.s32.totalorder %s129, %s130
      %p139 = scmp.eq.s32.totalorder %s32, 0
      %p140 = por %p138, %p139
      %p141 = scmp.ne.s32.totalorder %s129, %s130
      %p142 = scmp.eq.s32.totalorder %s33, 1
      %p143 = por %p141, %p142
      %p145 = scmp.ne.s32.totalorder %s130, %s144
      %p146 = scmp.eq.s32.totalorder %s33, 0
      %p147 = por %p145, %p146
      %s149 = sadd.s32 %s148, 1
      %p152 = scmp.eq.s32.totalorder %s27, 1
      %p153 = scmp.ne.s32.totalorder %s148, %s150
      %p154 = scmp.eq.s32.totalorder %s27, 0
      %p155 = por %p153, %p154
      %p156 = scmp.ne.s32.totalorder %s148, %s150
      %p157 = scmp.eq.s32.totalorder %s32, 1
      %p158 = por %p156, %p157
      %p159 = scmp.ne.s32.totalorder %s150, %s151
      %p160 = scmp.eq.s32.totalorder %s32, 0
      %p161 = por %p159, %p160
      %p162 = scmp.ne.s32.totalorder %s150, %s151
      %p163 = scmp.eq.s32.totalorder %s33, 1
      %p164 = por %p162, %p163
      %p166 = scmp.ne.s32.totalorder %s151, %s165
      %p167 = scmp.eq.s32.totalorder %s33, 0
      %p168 = por %p166, %p167
      %s170 = sadd.s32 %s169, 1
      %p173 = scmp.eq.s32.totalorder %s27, 1
      %p174 = scmp.ne.s32.totalorder %s169, %s171
      %p175 = scmp.eq.s32.totalorder %s27, 0
      %p176 = por %p174, %p175
      %p177 = scmp.ne.s32.totalorder %s169, %s171
      %p178 = scmp.eq.s32.totalorder %s32, 1
      %p179 = por %p177, %p178
      %p180 = scmp.ne.s32.totalorder %s171, %s172
      %p181 = scmp.eq.s32.totalorder %s32, 0
      %p182 = por %p180, %p181
      %p183 = scmp.ne.s32.totalorder %s171, %s172
      %p184 = scmp.eq.s32.totalorder %s33, 1
      %p185 = por %p183, %p184
      %p187 = scmp.ne.s32.totalorder %s172, %s186
      %p188 = scmp.eq.s32.totalorder %s33, 0
      %p189 = por %p187, %p188
      %s190 = ssub.s32 %s34, %s46
      %s191 = ssub.s32 %s35, %s42
      %s192 = sor.u32 %s190, %s191
      %p193 = scmp.eq.s32.totalorder %s192, 0
      %s195 = sadd.s32 %s194, 1
      %s196 = scalar_select %p193, %s194, %s195
      %p199 = pneg %p193
      %p200 = scmp.eq.s32.totalorder %s27, 1
      %p201 = por %p199, %p200
      %p202 = scmp.ne.s32.totalorder %s194, %s197
      %p203 = scmp.eq.s32.totalorder %s27, 0
      %p204 = por %p202, %p203
      %p205 = scmp.ne.s32.totalorder %s194, %s197
      %p206 = scmp.eq.s32.totalorder %s32, 1
      %p207 = por %p205, %p206
      %p208 = scmp.ne.s32.totalorder %s197, %s198
      %p209 = scmp.eq.s32.totalorder %s32, 0
      %p210 = por %p208, %p209
      %p211 = scmp.ne.s32.totalorder %s197, %s198
      %p212 = scmp.eq.s32.totalorder %s33, 1
      %p213 = por %p211, %p212
      %p215 = scmp.ne.s32.totalorder %s198, %s214
      %p216 = scmp.eq.s32.totalorder %s33, 0
      %p217 = por %p215, %p216
      %s218 = ssub.s32 %s34, %s46
      %s219 = ssub.s32 %s35, %s42
      %s220 = sor.u32 %s218, %s219
      %p221 = scmp.eq.s32.totalorder %s220, 0
      %s223 = sadd.s32 %s222, 1
      %s224 = scalar_select %p221, %s222, %s223
      %p227 = pneg %p221
      %p228 = scmp.eq.s32.totalorder %s27, 1
      %p229 = por %p227, %p228
      %p230 = scmp.ne.s32.totalorder %s222, %s225
      %p231 = scmp.eq.s32.totalorder %s27, 0
      %p232 = por %p230, %p231
      %p233 = scmp.ne.s32.totalorder %s222, %s225
      %p234 = scmp.eq.s32.totalorder %s32, 1
      %p235 = por %p233, %p234
      %p236 = scmp.ne.s32.totalorder %s225, %s226
      %p237 = scmp.eq.s32.totalorder %s32, 0
      %p238 = por %p236, %p237
      %p239 = scmp.ne.s32.totalorder %s225, %s226
      %p240 = scmp.eq.s32.totalorder %s33, 1
      %p241 = por %p239, %p240
      %p243 = scmp.ne.s32.totalorder %s226, %s242
      %p244 = scmp.eq.s32.totalorder %s33, 0
      %p245 = por %p243, %p244
      %p246 = scmp.le.s32.totalorder 1, %s27
      %p247 = scmp.lt.s32.totalorder %s27, 3
      %p248 = pnand %p246, %p247
      %p249 = pneg %p248
      // Predicated region
      $region9: #{tpu_custom_call.1} parent=5 // pred_check
        _
      $region10: #{tpu_custom_call.1} parent=5 // pred_check_branch
        %251 = sbr.rel (%p248) target = $region12
      $region11: #{tpu_custom_call.1} parent=5 // pred_region
        %s252 = ssub.s32 %s27, 1
        // Predicated region
        $region13: #{tpu_custom_call.1} parent=11 // pred_check
          %p253 = pneg %p140
        $region14: #{tpu_custom_call.1} parent=11 // pred_check_branch
          %255 = sbr.rel (%p253) target = $region16
        $region15: #{tpu_custom_call.1} parent=11 // pred_region
          _
        $region16: #{tpu_custom_call.1} parent=11 // pred_fallthru
          _
        // Predicated region
        $region17: #{tpu_custom_call.1} parent=11 // pred_check
          %p256 = pneg %p161
        $region18: #{tpu_custom_call.1} parent=11 // pred_check_branch
          %258 = sbr.rel (%p256) target = $region20
        $region19: #{tpu_custom_call.1} parent=11 // pred_region
          %s260 = ssub.s32 128, 128
          %261 = vsyncadd [#allocation11], %s260
          %s262 = sshll.u32 [#allocation10], 4
          %s263 = int_to_ptr.vmem [resolvable:$true] %s262
          %268 = dma.hbm_to_vmem [thread:$0]  %s4, 128, %s263, [#allocation11], 64, 64, 4
        $region20: #{tpu_custom_call.1} parent=11 // pred_fallthru
          _
        // Predicated region
        $region21: #{tpu_custom_call.1} parent=11 // pred_check
          %p269 = pneg %p182
        $region22: #{tpu_custom_call.1} parent=11 // pred_check_branch
          %271 = sbr.rel (%p269) target = $region24
        $region23: #{tpu_custom_call.1} parent=11 // pred_region
          _
        $region24: #{tpu_custom_call.1} parent=11 // pred_fallthru
          _
      $region12: #{tpu_custom_call.1} parent=5 // pred_fallthru
        _
      %p272 = scmp.lt.s32.totalorder %s27, 2
      // Predicated region
      $region25: #{tpu_custom_call.1} parent=5 // pred_check
        %p273 = pneg %p272
      $region26: #{tpu_custom_call.1} parent=5 // pred_check_branch
        %275 = sbr.rel (%p273) target = $region28
      $region27: #{tpu_custom_call.1} parent=5 // pred_region
        // Predicated region
        $region29: #{tpu_custom_call.1} parent=27 // pred_check
          %p276 = pneg %p61
        $region30: #{tpu_custom_call.1} parent=27 // pred_check_branch
          %278 = sbr.rel (%p276) target = $region32
        $region31: #{tpu_custom_call.1} parent=27 // pred_region
          %s279 = sand.u32 %s51, 1
          %s280 = scalar_lea.sflag [#allocation5], %s279
          %s281 = sand.u32 %s51, 1
          %s282 = smul.addr %s281, 8
          %s283 = scalar_lea.vmem [#allocation4], %s282
          %s285 = ssub.s32 128, 128
          %286 = vsyncadd %s280, %s285
          %s287 = sadd.s32 %s35, %s34
          %s288 = smul.addr %s287, 128
          %s289 = scalar_lea.hbm %s0, %s288
          %s291 = sshll.u32 %s283, 4
          %s292 = int_to_ptr.vmem [resolvable:$true] %s291
          %294 = dma.hbm_to_vmem [thread:$0]  %s289, 128, %s292, %s280
        $region32: #{tpu_custom_call.1} parent=27 // pred_fallthru
          _
        // Predicated region
        $region33: #{tpu_custom_call.1} parent=27 // pred_check
          %p295 = pneg %p87
        $region34: #{tpu_custom_call.1} parent=27 // pred_check_branch
          %297 = sbr.rel (%p295) target = $region36
        $region35: #{tpu_custom_call.1} parent=27 // pred_region
          %s298 = sand.u32 %s27, 1
          %s299 = scalar_lea.sflag [#allocation8], %s298
          %s300 = sand.u32 %s77, 1
          %s301 = smul.addr %s300, 8
          %s302 = scalar_lea.vmem [#allocation7], %s301
          %s304 = ssub.s32 128, 128
          %305 = vsyncadd %s299, %s304
          %s306 = smul.addr %s34, 128
          %s307 = scalar_lea.hbm %s1, %s306
          %s309 = sshll.u32 %s302, 4
          %s310 = int_to_ptr.vmem [resolvable:$true] %s309
          %312 = dma.hbm_to_vmem [thread:$0]  %s307, 128, %s310, %s299
        $region36: #{tpu_custom_call.1} parent=27 // pred_fallthru
          _
        // Predicated region
        $region37: #{tpu_custom_call.1} parent=27 // pred_check
          %p313 = pneg %p113
        $region38: #{tpu_custom_call.1} parent=27 // pred_check_branch
          %315 = sbr.rel (%p313) target = $region40
        $region39: #{tpu_custom_call.1} parent=27 // pred_region
          %s316 = sand.u32 %s27, 1
          %s317 = scalar_lea.sflag [#allocation8], %s316
          %s318 = sand.u32 %s103, 1
          %s319 = smul.addr %s318, 8
          %s320 = scalar_lea.vmem [#allocation9], %s319
          %s322 = ssub.s32 128, 128
          %323 = vsyncadd %s317, %s322
          %s324 = smul.addr %s34, 128
          %s325 = scalar_lea.hbm %s2, %s324
          %s327 = sshll.u32 %s320, 4
          %s328 = int_to_ptr.vmem [resolvable:$true] %s327
          %330 = dma.hbm_to_vmem [thread:$0]  %s325, 128, %s328, %s317
        $region40: #{tpu_custom_call.1} parent=27 // pred_fallthru
          _
      $region28: #{tpu_custom_call.1} parent=5 // pred_fallthru
        _
      %p331 = scmp.le.s32.totalorder 1, %s27
      %p332 = scmp.lt.s32.totalorder %s27, 3
      %p333 = pnand %p331, %p332
      %p334 = pneg %p333
      // Predicated region
      $region41: #{tpu_custom_call.1} parent=5 // pred_check
        _
      $region42: #{tpu_custom_call.1} parent=5 // pred_check_branch
        %336 = sbr.rel (%p333) target = $region44
      $region43: #{tpu_custom_call.1} parent=5 // pred_region
        %s337 = ssub.s32 %s27, 1
        %s338 = sand.u32 %s54, 1
        %s339 = scalar_lea.sflag [#allocation5], %s338
        %s340 = sand.u32 %s54, 1
        %s341 = smul.addr %s340, 8
        %s342 = scalar_lea.vmem [#allocation4], %s341
        // Predicated region
        $region45: #{tpu_custom_call.1} parent=43 // pred_check
          %p343 = pneg %p67
        $region46: #{tpu_custom_call.1} parent=43 // pred_check_branch
          %345 = sbr.rel (%p343) target = $region48
        $region47: #{tpu_custom_call.1} parent=43 // pred_region
          %346 = dma.done %s339, 128
        $region48: #{tpu_custom_call.1} parent=43 // pred_fallthru
          _
        %s347 = sand.u32 %s32, 1
        %s348 = scalar_lea.sflag [#allocation8], %s347
        %s349 = sand.u32 %s80, 1
        %s350 = smul.addr %s349, 8
        %s351 = scalar_lea.vmem [#allocation7], %s350
        // Predicated region
        $region49: #{tpu_custom_call.1} parent=43 // pred_check
          %p352 = pneg %p93
        $region50: #{tpu_custom_call.1} parent=43 // pred_check_branch
          %354 = sbr.rel (%p352) target = $region52
        $region51: #{tpu_custom_call.1} parent=43 // pred_region
          %355 = dma.done %s348, 128
        $region52: #{tpu_custom_call.1} parent=43 // pred_fallthru
          _
        %s356 = sand.u32 %s32, 1
        %s357 = scalar_lea.sflag [#allocation8], %s356
        %s358 = sand.u32 %s106, 1
        %s359 = smul.addr %s358, 8
        %s360 = scalar_lea.vmem [#allocation9], %s359
        // Predicated region
        $region53: #{tpu_custom_call.1} parent=43 // pred_check
          %p361 = pneg %p119
        $region54: #{tpu_custom_call.1} parent=43 // pred_check_branch
          %363 = sbr.rel (%p361) target = $region56
        $region55: #{tpu_custom_call.1} parent=43 // pred_region
          %364 = dma.done %s357, 128
        $region56: #{tpu_custom_call.1} parent=43 // pred_fallthru
          _
        // Predicated region
        $region57: #{tpu_custom_call.1} parent=43 // pred_check
          %p365 = pneg %p161
        $region58: #{tpu_custom_call.1} parent=43 // pred_check_branch
          %367 = sbr.rel (%p365) target = $region60
        $region59: #{tpu_custom_call.1} parent=43 // pred_region
          %368 = dma.done [#allocation11], 128
        $region60: #{tpu_custom_call.1} parent=43 // pred_fallthru
          _
        %s369 = sand.u32 %s54, 1
        %s370 = scalar_lea.sflag [#allocation5], %s369
        %s371 = sand.u32 %s54, 1
        %s372 = smul.addr %s371, 8
        %s373 = scalar_lea.vmem [#allocation4], %s372
        %p374 = pneg %p67
        %p375 = pneg %p64
        %s376 = sand.u32 %s32, 1
        %s377 = scalar_lea.sflag [#allocation8], %s376
        %s378 = sand.u32 %s80, 1
        %s379 = smul.addr %s378, 8
        %s380 = scalar_lea.vmem [#allocation7], %s379
        %p381 = pneg %p93
        %p382 = pneg %p90
        %s383 = sand.u32 %s32, 1
        %s384 = scalar_lea.sflag [#allocation8], %s383
        %s385 = sand.u32 %s106, 1
        %s386 = smul.addr %s385, 8
        %s387 = scalar_lea.vmem [#allocation9], %s386
        %p388 = pneg %p119
        %p389 = pneg %p116
        %p390 = pneg %p140
        %p391 = pneg %p137
        %p392 = pneg %p161
        %p393 = pneg %p158
        %p394 = pneg %p182
        %p395 = pneg %p179
        %p396 = pneg %p210
        %p397 = pneg %p207
        %s398 = sand.u32 %s197, 1
        %s399 = scalar_lea.sflag [#allocation6], %s398
        %s400 = sand.u32 %s197, 1
        %s401 = smul.addr %s400, 8
        %s402 = scalar_lea.vmem [#allocation12], %s401
        %p403 = pneg %p238
        %p404 = pneg %p235
        %s405 = sand.u32 %s225, 1
        %s406 = scalar_lea.sflag [#allocation14], %s405
        %s407 = sand.u32 %s225, 1
        %s408 = smul.addr %s407, 8
        %s409 = scalar_lea.vmem [#allocation13], %s408
        %p411 = scmp.eq.s32.totalorder %s37, 0
        // Predicated region
        $region61: #{tpu_custom_call.1} parent=43 // pred_check
          %p412 = pneg %p411
        $region62: #{tpu_custom_call.1} parent=43 // pred_check_branch
          %414 = sbr.rel (%p412) target = $region64
        $region63: #{tpu_custom_call.1} parent=43 // pred_region
          %v415 = vld [vmem:[%s351] sm:$0xff]
          %v416 = vpack.c.bf16 %v415, %v415
          %v417 = vld [vmem:[%s360] sm:$0xff]
          %v418 = vpack.c.bf16 %v417, %v417
          %v419 = vld [vmem:[#allocation10] sm:$0xf]
          %v420 = vld [vmem:[#allocation10 + $0x4] sm:$0xf]
          %v423 = vunpack.c.l.b16 %v419
          %v424 = vunpack.c.l.b16 %v420
          %v425 = vpack.c.b16 %v424, %v423
          %vm427 = vcmask 130048
          %v429 = vsel %vm427, %v416, 0
          %431 = vmatprep.subr.bf16.mxu0 0
          %432 = vmatpush1.bf16.msra.mxu0 %v425
          %433 = vmatprep.subr.bf16.mxu0 0
          %434 = vmatpush1.bf16.msra.mxu0 0
          %435 = vmatprep.subr.bf16.mxu0 0
          %436 = vmatpush1.bf16.msra.mxu0 0
          %437 = vmatprep.subr.bf16.mxu0 0
          %438 = vmatpush1.bf16.msra.mxu0 0
          %439 = vmatprep.subr.bf16.mxu0 0
          %440 = vmatpush1.bf16.msra.mxu0 0
          %441 = vmatprep.subr.bf16.mxu0 0
          %442 = vmatpush1.bf16.msra.mxu0 0
          %443 = vmatprep.subr.bf16.mxu0 0
          %444 = vmatpush1.bf16.msra.mxu0 0
          %445 = vmatprep.subr.bf16.mxu0 0
          %446 = vmatpush1.bf16.msra.mxu0 0
          %447 = vmatprep.subr.bf16.mxu0 0
          %448 = vmatpush1.bf16.msra.mxu0 0
          %449 = vmatprep.subr.bf16.mxu0 0
          %450 = vmatpush1.bf16.msra.mxu0 0
          %451 = vmatprep.subr.bf16.mxu0 0
          %452 = vmatpush1.bf16.msra.mxu0 0
          %453 = vmatprep.subr.bf16.mxu0 0
          %454 = vmatpush1.bf16.msra.mxu0 0
          %455 = vmatprep.subr.bf16.mxu0 0
          %456 = vmatpush1.bf16.msra.mxu0 0
          %457 = vmatprep.subr.bf16.mxu0 0
          %458 = vmatpush1.bf16.msra.mxu0 0
          %459 = vmatprep.subr.bf16.mxu0 0
          %460 = vmatpush1.bf16.msra.mxu0 0
          %461 = vmatprep.subr.bf16.mxu0 0
          %462 = vmatpush1.bf16.msra.mxu0 0
          %463 = vmatprep.mubr.bf16.mxu0 0
          %464 = vmatmul.mubr.bf16.gmra.mrb[0].mxu0 %v429
          %v465 = vpop.f32.mrb[0].mxu0
          %v466 = vadd.f32 0.0, %v465
          %v467 = vpop.f32.mrb[0].mxu0
          %v468 = vpop.f32.mrb[0].mxu0
          %v469 = vpop.f32.mrb[0].mxu0
          %470 = vdwg.mxu0
          %v471 = vpack.c.bf16 %v466, %v466
          %vm472 = vcmask 257024
          %473 = vst.msk [vmem:[#allocation2] sm:$0xf] %vm472, %v471
          %v474 = vld [vmem:[%s5] sm:$0xf]
          %v475 = vld [vmem:[%s5 + $0x4] sm:$0xf]
          %v478 = vunpack.c.l.b16 %v474
          %v479 = vunpack.c.l.b16 %v475
          %v480 = vpack.c.b16 %v479, %v478
          %v483 = vsel %vm427, %v418, 0
          %485 = vmatprep.subr.bf16.mxu0 0
          %486 = vmatpush1.bf16.msra.mxu0 %v480
          %487 = vmatprep.subr.bf16.mxu0 0
          %488 = vmatpush1.bf16.msra.mxu0 0
          %489 = vmatprep.subr.bf16.mxu0 0
          %490 = vmatpush1.bf16.msra.mxu0 0
          %491 = vmatprep.subr.bf16.mxu0 0
          %492 = vmatpush1.bf16.msra.mxu0 0
          %493 = vmatprep.subr.bf16.mxu0 0
          %494 = vmatpush1.bf16.msra.mxu0 0
          %495 = vmatprep.subr.bf16.mxu0 0
          %496 = vmatpush1.bf16.msra.mxu0 0
          %497 = vmatprep.subr.bf16.mxu0 0
          %498 = vmatpush1.bf16.msra.mxu0 0
          %499 = vmatprep.subr.bf16.mxu0 0
          %500 = vmatpush1.bf16.msra.mxu0 0
          %501 = vmatprep.subr.bf16.mxu0 0
          %502 = vmatpush1.bf16.msra.mxu0 0
          %503 = vmatprep.subr.bf16.mxu0 0
          %504 = vmatpush1.bf16.msra.mxu0 0
          %505 = vmatprep.subr.bf16.mxu0 0
          %506 = vmatpush1.bf16.msra.mxu0 0
          %507 = vmatprep.subr.bf16.mxu0 0
          %508 = vmatpush1.bf16.msra.mxu0 0
          %509 = vmatprep.subr.bf16.mxu0 0
          %510 = vmatpush1.bf16.msra.mxu0 0
          %511 = vmatprep.subr.bf16.mxu0 0
          %512 = vmatpush1.bf16.msra.mxu0 0
          %513 = vmatprep.subr.bf16.mxu0 0
          %514 = vmatpush1.bf16.msra.mxu0 0
          %515 = vmatprep.subr.bf16.mxu0 0
          %516 = vmatpush1.bf16.msra.mxu0 0
          %517 = vmatprep.mubr.bf16.mxu0 0
          %518 = vmatmul.mubr.bf16.gmra.mrb[0].mxu0 %v483
          %v519 = vpop.f32.mrb[0].mxu0
          %v520 = vadd.f32 0.0, %v519
          %v521 = vpop.f32.mrb[0].mxu0
          %v522 = vpop.f32.mrb[0].mxu0
          %v523 = vpop.f32.mrb[0].mxu0
          %524 = vdwg.mxu0
          %v525 = vpack.c.bf16 %v520, %v520
          %526 = vst.msk [vmem:[#allocation3] sm:$0xf] %vm472, %v525
        $region64: #{tpu_custom_call.1} parent=43 // pred_fallthru
          _
        %v527 = vld [vmem:[%s342] sm:$0xff]
        %v528 = vpack.c.bf16 %v527, %v527
        %v529 = vld [vmem:[%s3] sm:$0xf]
        %v530 = vld [vmem:[%s3 + $0x4] sm:$0xf]
        %v533 = vunpack.c.l.b16 %v529
        %v534 = vunpack.c.l.b16 %v530
        %v535 = vpack.c.b16 %v534, %v533
        %vm537 = vcmask 130048
        %v539 = vsel %vm537, %v528, 0
        %541 = vmatprep.subr.bf16.mxu0 0
        %542 = vmatpush1.bf16.msra.mxu0 %v535
        %543 = vmatprep.subr.bf16.mxu0 0
        %544 = vmatpush1.bf16.msra.mxu0 0
        %545 = vmatprep.subr.bf16.mxu0 0
        %546 = vmatpush1.bf16.msra.mxu0 0
        %547 = vmatprep.subr.bf16.mxu0 0
        %548 = vmatpush1.bf16.msra.mxu0 0
        %549 = vmatprep.subr.bf16.mxu0 0
        %550 = vmatpush1.bf16.msra.mxu0 0
        %551 = vmatprep.subr.bf16.mxu0 0
        %552 = vmatpush1.bf16.msra.mxu0 0
        %553 = vmatprep.subr.bf16.mxu0 0
        %554 = vmatpush1.bf16.msra.mxu0 0
        %555 = vmatprep.subr.bf16.mxu0 0
        %556 = vmatpush1.bf16.msra.mxu0 0
        %557 = vmatprep.subr.bf16.mxu0 0
        %558 = vmatpush1.bf16.msra.mxu0 0
        %559 = vmatprep.subr.bf16.mxu0 0
        %560 = vmatpush1.bf16.msra.mxu0 0
        %561 = vmatprep.subr.bf16.mxu0 0
        %562 = vmatpush1.bf16.msra.mxu0 0
        %563 = vmatprep.subr.bf16.mxu0 0
        %564 = vmatpush1.bf16.msra.mxu0 0
        %565 = vmatprep.subr.bf16.mxu0 0
        %566 = vmatpush1.bf16.msra.mxu0 0
        %567 = vmatprep.subr.bf16.mxu0 0
        %568 = vmatpush1.bf16.msra.mxu0 0
        %569 = vmatprep.subr.bf16.mxu0 0
        %570 = vmatpush1.bf16.msra.mxu0 0
        %571 = vmatprep.subr.bf16.mxu0 0
        %572 = vmatpush1.bf16.msra.mxu0 0
        %573 = vmatprep.mubr.bf16.mxu0 0
        %574 = vmatmul.mubr.bf16.gmra.mrb[0].mxu0 %v539
        %v575 = vpop.f32.mrb[0].mxu0
        %v576 = vadd.f32 0.0, %v575
        %v577 = vpop.f32.mrb[0].mxu0
        %v578 = vpop.f32.mrb[0].mxu0
        %v579 = vpop.f32.mrb[0].mxu0
        %580 = vdwg.mxu0
        %v581 = vpack.c.bf16 %v576, %v576
        %v582 = vld [vmem:[#allocation2] sm:$0xf]
        %vm583 = vcmask 261120
        %v585 = vsel %vm583, %v581, 0
        %v588 = vsel %vm583, %v582, 0
        %590 = vmatprep.subr.bf16.mxu0 0
        %591 = vmatpush1.bf16.xpose.msra.mxu0 %v588
        %592 = vmatprep.subr.bf16.mxu0 0
        %593 = vmatpush1.bf16.xpose.msra.mxu0 0
        %594 = vmatprep.subr.bf16.mxu0 0
        %595 = vmatpush1.bf16.xpose.msra.mxu0 0
        %596 = vmatprep.subr.bf16.mxu0 0
        %597 = vmatpush1.bf16.xpose.msra.mxu0 0
        %598 = vmatprep.subr.bf16.mxu0 0
        %599 = vmatpush1.bf16.xpose.msra.mxu0 0
        %600 = vmatprep.subr.bf16.mxu0 0
        %601 = vmatpush1.bf16.xpose.msra.mxu0 0
        %602 = vmatprep.subr.bf16.mxu0 0
        %603 = vmatpush1.bf16.xpose.msra.mxu0 0
        %604 = vmatprep.subr.bf16.mxu0 0
        %605 = vmatpush1.bf16.xpose.msra.mxu0 0
        %606 = vmatprep.subr.bf16.mxu0 0
        %607 = vmatpush1.bf16.xpose.msra.mxu0 0
        %608 = vmatprep.subr.bf16.mxu0 0
        %609 = vmatpush1.bf16.xpose.msra.mxu0 0
        %610 = vmatprep.subr.bf16.mxu0 0
        %611 = vmatpush1.bf16.xpose.msra.mxu0 0
        %612 = vmatprep.subr.bf16.mxu0 0
        %613 = vmatpush1.bf16.xpose.msra.mxu0 0
        %614 = vmatprep.subr.bf16.mxu0 0
        %615 = vmatpush1.bf16.xpose.msra.mxu0 0
        %616 = vmatprep.subr.bf16.mxu0 0
        %617 = vmatpush1.bf16.xpose.msra.mxu0 0
        %618 = vmatprep.subr.bf16.mxu0 0
        %619 = vmatpush1.bf16.xpose.msra.mxu0 0
        %620 = vmatprep.subr.bf16.mxu0 0
        %621 = vmatpush1.bf16.xpose.msra.mxu0 0
        %622 = vmatprep.mubr.bf16.mxu0 0
        %623 = vmatmul.mubr.bf16.gmra.mrb[0].mxu0 %v585
        %v624 = vpop.f32.mrb[0].mxu0
        %v625 = vadd.f32 0.0, %v624
        %v626 = vpop.f32.mrb[0].mxu0
        %v627 = vpop.f32.mrb[0].mxu0
        %v628 = vpop.f32.mrb[0].mxu0
        %629 = vdwg.mxu0
        %vm630 = vcmask 64512
        %v631 = vsel %vm630, %v625, -inf
        %632 = vmax.xlane.f32.xlu0 %v631
        %v633 = vpop.xlane.xlu0 %632
        %v634 = vsub.f32 %v625, %v633
        %v635 = vmul.f32 %v634, 1.442695
        %v636 = vpow.pop %v635
        %v637 = vsel %vm630, %v636, 0.0
        %638 = vadd.xlane.f32.xlu0 %v637
        %v639 = vpop.xlane.xlu0 %638
        %v640 = vrcp.pop %v639
        %v641 = vmul.f32 %v636, %v640
        %v642 = vpack.c.bf16 %v641, %v641
        %v643 = vld [vmem:[#allocation3] sm:$0xf]
        %v645 = vsel %vm630, %v642, 0
        %vm647 = vcmask 1043456
        %v649 = vsel %vm647, %v643, 0
        %651 = vmatprep.subr.bf16.mxu0 0
        %652 = vmatpush1.bf16.msra.mxu0 %v649
        %653 = vmatprep.subr.bf16.mxu0 0
        %654 = vmatpush1.bf16.msra.mxu0 0
        %655 = vmatprep.subr.bf16.mxu0 0
        %656 = vmatpush1.bf16.msra.mxu0 0
        %657 = vmatprep.subr.bf16.mxu0 0
        %658 = vmatpush1.bf16.msra.mxu0 0
        %659 = vmatprep.subr.bf16.mxu0 0
        %660 = vmatpush1.bf16.msra.mxu0 0
        %661 = vmatprep.subr.bf16.mxu0 0
        %662 = vmatpush1.bf16.msra.mxu0 0
        %663 = vmatprep.subr.bf16.mxu0 0
        %664 = vmatpush1.bf16.msra.mxu0 0
        %665 = vmatprep.subr.bf16.mxu0 0
        %666 = vmatpush1.bf16.msra.mxu0 0
        %667 = vmatprep.subr.bf16.mxu0 0
        %668 = vmatpush1.bf16.msra.mxu0 0
        %669 = vmatprep.subr.bf16.mxu0 0
        %670 = vmatpush1.bf16.msra.mxu0 0
        %671 = vmatprep.subr.bf16.mxu0 0
        %672 = vmatpush1.bf16.msra.mxu0 0
        %673 = vmatprep.subr.bf16.mxu0 0
        %674 = vmatpush1.bf16.msra.mxu0 0
        %675 = vmatprep.subr.bf16.mxu0 0
        %676 = vmatpush1.bf16.msra.mxu0 0
        %677 = vmatprep.subr.bf16.mxu0 0
        %678 = vmatpush1.bf16.msra.mxu0 0
        %679 = vmatprep.subr.bf16.mxu0 0
        %680 = vmatpush1.bf16.msra.mxu0 0
        %681 = vmatprep.subr.bf16.mxu0 0
        %682 = vmatpush1.bf16.msra.mxu0 0
        %683 = vmatprep.mubr.bf16.mxu0 0
        %684 = vmatmul.mubr.bf16.gmra.mrb[0].mxu0 %v645
        %v685 = vpop.f32.mrb[0].mxu0
        %v686 = vadd.f32 0.0, %v685
        %v687 = vpop.f32.mrb[0].mxu0
        %v688 = vpop.f32.mrb[0].mxu0
        %v689 = vpop.f32.mrb[0].mxu0
        %690 = vdwg.mxu0
        %691 = vst.msk [vmem:[%s402] sm:$0xff] %vm583, %v686
        %692 = vst.msk [vmem:[%s409] sm:$0xff] %vm630, %v641
        %s693 = sand.u32 %s197, 1
        %s694 = scalar_lea.sflag [#allocation6], %s693
        %s695 = sand.u32 %s197, 1
        %s696 = smul.addr %s695, 8
        %s697 = scalar_lea.vmem [#allocation12], %s696
        %s698 = sand.u32 %s225, 1
        %s699 = scalar_lea.sflag [#allocation14], %s698
        %s700 = sand.u32 %s225, 1
        %s701 = smul.addr %s700, 8
        %s702 = scalar_lea.vmem [#allocation13], %s701
        // Predicated region
        $region65: #{tpu_custom_call.1} parent=43 // pred_check
          %p703 = pneg %p207
        $region66: #{tpu_custom_call.1} parent=43 // pred_check_branch
          %705 = sbr.rel (%p703) target = $region68
        $region67: #{tpu_custom_call.1} parent=43 // pred_region
          %s707 = ssub.s32 128, 128
          %708 = vsyncadd %s694, %s707
          %s709 = sadd.s32 %s37, %s36
          %s710 = smul.addr %s709, 128
          %s711 = scalar_lea.hbm %s6, %s710
          %s713 = sshll.u32 %s697, 4
          %s714 = int_to_ptr.vmem [resolvable:$true] %s713
          %716 = dma.vmem_to_hbm [thread:$0]  %s714, 128, %s711, %s694
        $region68: #{tpu_custom_call.1} parent=43 // pred_fallthru
          _
        // Predicated region
        $region69: #{tpu_custom_call.1} parent=43 // pred_check
          %p717 = pneg %p235
        $region70: #{tpu_custom_call.1} parent=43 // pred_check_branch
          %719 = sbr.rel (%p717) target = $region72
        $region71: #{tpu_custom_call.1} parent=43 // pred_region
          %s721 = ssub.s32 128, 128
          %722 = vsyncadd %s699, %s721
          %s723 = sadd.s32 %s37, %s36
          %s724 = smul.addr %s723, 128
          %s725 = scalar_lea.hbm %s7, %s724
          %s727 = sshll.u32 %s702, 4
          %s728 = int_to_ptr.vmem [resolvable:$true] %s727
          %730 = dma.vmem_to_hbm [thread:$0]  %s728, 128, %s725, %s699
        $region72: #{tpu_custom_call.1} parent=43 // pred_fallthru
          _
      $region44: #{tpu_custom_call.1} parent=5 // pred_fallthru
        _
      %p731 = scmp.le.s32.totalorder 2, %s27
      // Predicated region
      $region73: #{tpu_custom_call.1} parent=5 // pred_check
        %p732 = pneg %p731
      $region74: #{tpu_custom_call.1} parent=5 // pred_check_branch
        %734 = sbr.rel (%p732) target = $region76
      $region75: #{tpu_custom_call.1} parent=5 // pred_region
        %s735 = ssub.s32 %s27, 2
        // Predicated region
        $region77: #{tpu_custom_call.1} parent=75 // pred_check
          %p736 = pneg %p213
        $region78: #{tpu_custom_call.1} parent=75 // pred_check_branch
          %738 = sbr.rel (%p736) target = $region80
        $region79: #{tpu_custom_call.1} parent=75 // pred_region
          %s739 = sand.u32 %s198, 1
          %s740 = scalar_lea.sflag [#allocation6], %s739
          %s741 = sand.u32 %s198, 1
          %s742 = smul.addr %s741, 8
          %s743 = scalar_lea.vmem [#allocation12], %s742
          %744 = dma.done %s740, 128
        $region80: #{tpu_custom_call.1} parent=75 // pred_fallthru
          _
        // Predicated region
        $region81: #{tpu_custom_call.1} parent=75 // pred_check
          %p745 = pneg %p241
        $region82: #{tpu_custom_call.1} parent=75 // pred_check_branch
          %747 = sbr.rel (%p745) target = $region84
        $region83: #{tpu_custom_call.1} parent=75 // pred_region
          %s748 = sand.u32 %s226, 1
          %s749 = scalar_lea.sflag [#allocation14], %s748
          %s750 = sand.u32 %s226, 1
          %s751 = smul.addr %s750, 8
          %s752 = scalar_lea.vmem [#allocation13], %s751
          %753 = dma.done %s749, 128
        $region84: #{tpu_custom_call.1} parent=75 // pred_fallthru
          _
      $region76: #{tpu_custom_call.1} parent=5 // pred_fallthru
        _
    $region6: #{tpu_custom_call.1} parent=1 // loop_footer
      %s31 = sadd.s32 1, %s27
    $region7: #{tpu_custom_call.1} parent=1 // loop_footer_branch
      %26 = sbr.rel target = $region3
    $region8: #{tpu_custom_call.1} parent=1 // loop_exit
      _
    %754 = vsyncpa [#allocation5], 1
    %s755 = scalar_lea.sflag [#allocation5], 1
    %756 = vsyncpa %s755, 1
    %757 = vsyncpa [#allocation8], 1
    %s758 = scalar_lea.sflag [#allocation8], 1
    %759 = vsyncpa %s758, 1
    %760 = vsyncpa [#allocation11], 1
    %761 = vsyncpa [#allocation6], 1
    %s762 = scalar_lea.sflag [#allocation6], 1
    %763 = vsyncpa %s762, 1
    %764 = vsyncpa [#allocation14], 1
    %s765 = scalar_lea.sflag [#allocation14], 1
    %766 = vsyncpa %s765, 1

</llo_original>
